<compile_context>
chip_gen: v7x
topology: tpu7x:2x2x1
jax: 0.10.0
libtpu: 0.0.40
codegen_flags: <defaults>
</compile_context>

<pallas_src>
import functools

import numpy as np
import jax
import jax.numpy as jnp
from jax.experimental import pallas as pl
from jax.experimental.pallas import tpu as pltpu


def _round_up(x, m):
    return ((x + m - 1) // m) * m


def _supcon_kernel(anchor_ref, contrast_ref, rowlab_ref, collab_ref, out_ref,
                   *, tile_a, n_anchor, n_total, inv_temp, loss_scale):
    # anchor_ref:   (TILE_A, D_pad)      native dtype, one row tile per grid step
    # contrast_ref: (A_pad,  D_pad)      native dtype, resident across the grid
    # rowlab_ref:   (TILE_A, 1)   int32  labels of the anchors in this tile
    # collab_ref:   (1, A_pad)    int32  labels of every contrast column
    # out_ref:      (1, 1)        f32    resident accumulator / final loss
    i = pl.program_id(0)

    @pl.when(i == 0)
    def _init():
        out_ref[...] = jnp.zeros_like(out_ref)

    # Scaled similarity on the MXU; contract the feature dim of both operands
    # (no transpose materialized, native-dtype inputs, f32 accumulation).
    s = jax.lax.dot_general(
        anchor_ref[...], contrast_ref[...],
        dimension_numbers=(((1,), (1,)), ((), ())),
        preferred_element_type=jnp.float32,
    ) * inv_temp                                                  # (TILE_A, A_pad) f32

    row_idx = i * tile_a + jax.lax.broadcasted_iota(jnp.int32, s.shape, 0)
    col_idx = jax.lax.broadcasted_iota(jnp.int32, s.shape, 1)
    valid_col = col_idx < n_total                                 # drop padded columns
    not_self = row_idx != col_idx                                 # drop self-contrast
    logits_mask = jnp.where(valid_col & not_self, 1.0, 0.0)

    # Positives: same label, not self, valid column.
    pos = jnp.where((rowlab_ref[...] == collab_ref[...]) & valid_col & not_self,
                    1.0, 0.0)                                     # (TILE_A, A_pad)

    # Numerically stable masked log-sum-exp. The max includes the self column
    # (exactly matching the PyTorch implementation's logits_max).
    m = jnp.max(jnp.where(valid_col, s, -1e30), axis=-1, keepdims=True)   # (TILE_A, 1)
    lse = jnp.log(jnp.sum(jnp.exp(s - m) * logits_mask, axis=-1, keepdims=True)) + m

    # mean_j [ pos_ij * (s_ij - lse_i) ] without building the full log_prob tile.
    pos_cnt = jnp.sum(pos, axis=-1, keepdims=True)                # (TILE_A, 1)
    pos_dot = jnp.sum(pos * s, axis=-1, keepdims=True)            # (TILE_A, 1)

    row_ids = i * tile_a + jax.lax.broadcasted_iota(jnp.int32, pos_cnt.shape, 0)
    row_valid = row_ids < n_anchor
    denom = jnp.where(row_valid, pos_cnt, 1.0)                    # guard padded rows only
    mean_log_prob_pos = (pos_dot - pos_cnt * lse) / denom

    out_ref[...] += jnp.sum(jnp.where(row_valid, mean_log_prob_pos, 0.0), keepdims=True)

    @pl.when(i == pl.num_programs(0) - 1)
    def _finalize():
        out_ref[...] = out_ref[...] * loss_scale                  # -(T/base_T)/n_anchor


def supcon_loss(features, labels=None, *, temperature=0.07, contrast_mode='all',
                base_temperature=0.07, block_rows=None):
    """Pallas TPU implementation of SupConLoss.forward (labels / SimCLR paths)."""
    if features.ndim < 3:
        raise ValueError('`features` needs to be [bsz, n_views, ...]')
    bsz, n_views = features.shape[0], features.shape[1]
    feats = features.reshape(bsz, n_views, -1)
    d = feats.shape[-1]

    # contrast_feature = torch.cat(torch.unbind(features, dim=1), dim=0): view-major rows.
    contrast = jnp.transpose(feats, (1, 0, 2)).reshape(n_views * bsz, d)

    # labels=None (SimCLR) is equivalent to every sample being its own class (eye mask).
    if labels is None:
        labels = jnp.arange(bsz, dtype=jnp.int32)
    labels = labels.astype(jnp.int32).reshape(bsz)
    col_labels = jnp.tile(labels, n_views)                        # label of each contrast row

    if contrast_mode == 'all':
        anchor, row_labels, n_anchor = contrast, col_labels, n_views * bsz
    elif contrast_mode == 'one':
        anchor, row_labels, n_anchor = contrast[:bsz], labels, bsz
    else:
        raise ValueError(f'Unknown mode: {contrast_mode}')
    n_total = n_views * bsz

    # ---- padded, lane-friendly layout -------------------------------------------------
    d_pad = _round_up(d, 128)                                     # lane-dense feature dim
    if block_rows is None:
        tile_a = 256 if n_anchor >= 256 else _round_up(n_anchor, 8)
    else:
        tile_a = _round_up(block_rows, 8)
    a_anchor_pad = _round_up(n_anchor, tile_a)
    a_total_pad = _round_up(n_total, 8)

    dt = features.dtype                                           # keep native dtype (bf16 ok)
    anchor_p = jnp.zeros((a_anchor_pad, d_pad), dt).at[:n_anchor, :d].set(anchor)
    contrast_p = jnp.zeros((a_total_pad, d_pad), dt).at[:n_total, :d].set(contrast)
    rowlab_p = jnp.full((a_anchor_pad, 1), -1, jnp.int32).at[:n_anchor, 0].set(row_labels)
    collab_p = jnp.full((1, a_total_pad), -2, jnp.int32).at[0, :n_total].set(col_labels)

    kernel = functools.partial(
        _supcon_kernel,
        tile_a=tile_a, n_anchor=n_anchor, n_total=n_total,
        inv_temp=float(1.0 / temperature),
        loss_scale=float(-(temperature / base_temperature) / n_anchor))

    out = pl.pallas_call(
        kernel,
        out_shape=jax.ShapeDtypeStruct((1, 1), jnp.float32),
        grid=(a_anchor_pad // tile_a,),
        in_specs=[
            pl.BlockSpec((tile_a, d_pad), lambda i: (i, 0)),        # anchor row tile (pipelined)
            pl.BlockSpec((a_total_pad, d_pad), lambda i: (0, 0)),   # contrast block, resident
            pl.BlockSpec((tile_a, 1), lambda i: (i, 0)),            # row labels
            pl.BlockSpec((1, a_total_pad), lambda i: (0, 0)),       # column labels, resident
        ],
        out_specs=pl.BlockSpec((1, 1), lambda i: (0, 0)),           # resident scalar accumulator
        compiler_params=pltpu.CompilerParams(
            dimension_semantics=("arbitrary",)),                    # reduction over the grid axis
    )(anchor_p, contrast_p, rowlab_p, collab_p)
    return out[0, 0]


def _reference_supcon(features, labels=None, mask=None, temperature=0.07,
                      contrast_mode='all', base_temperature=0.07):
    """Pure-JAX reference mirroring the PyTorch forward line-by-line."""
    bsz, n_views = features.shape[0], features.shape[1]
    feats = features.reshape(bsz, n_views, -1).astype(jnp.float32)
    if labels is None and mask is None:
        mask = jnp.eye(bsz, dtype=jnp.float32)
    elif labels is not None:
        lab = labels.reshape(-1, 1)
        mask = (lab == lab.T).astype(jnp.float32)
    else:
        mask = mask.astype(jnp.float32)
    contrast_feature = jnp.concatenate([feats[:, v] for v in range(n_views)], axis=0)
    if contrast_mode == 'one':
        anchor_feature, anchor_count = feats[:, 0], 1
    else:
        anchor_feature, anchor_count = contrast_feature, n_views
    adc = (anchor_feature @ contrast_feature.T) / temperature
    logits_max = jnp.max(adc, axis=1, keepdims=True)
    logits = adc - logits_max
    mask = jnp.tile(mask, (anchor_count, n_views))
    n_a = anchor_count * bsz
    idx = jnp.arange(n_a)
    logits_mask = jnp.ones_like(mask).at[idx, idx].set(0.0)
    mask = mask * logits_mask
    exp_logits = jnp.exp(logits) * logits_mask
    log_prob = logits - jnp.log(exp_logits.sum(1, keepdims=True))
    mean_log_prob_pos = (mask * log_prob).sum(1) / mask.sum(1)
    loss = -(temperature / base_temperature) * mean_log_prob_pos
    return loss.reshape(anchor_count, bsz).mean()


if __name__ == "__main__":
    key = jax.random.PRNGKey(0)
    bsz, n_views, dim = 8, 2, 32

    k1, k2 = jax.random.split(key)
    feats = jax.random.normal(k1, (bsz, n_views, dim), dtype=jnp.float32)
    feats = feats / jnp.linalg.norm(feats, axis=-1, keepdims=True)   # SupCon uses L2-normed feats
    labels = jax.random.randint(k2, (bsz,), 0, 4, dtype=jnp.int32)

    # Supervised, contrast_mode='all' (default), single-tile grid.
    loss_sup = jax.block_until_ready(supcon_loss(feats, labels))
    ref_sup = _reference_supcon(feats, labels)

    # Same case with a smaller row tile to exercise the multi-step accumulator grid.
    loss_sup_t = jax.block_until_ready(supcon_loss(feats, labels, block_rows=8))

    # Unsupervised SimCLR case (labels=None -> eye mask).
    loss_simclr = jax.block_until_ready(supcon_loss(feats, None))
    ref_simclr = _reference_supcon(feats, None)

    # contrast_mode='one'.
    loss_one = jax.block_until_ready(supcon_loss(feats, labels, contrast_mode='one'))
    ref_one = _reference_supcon(feats, labels, contrast_mode='one')

    assert np.allclose(np.asarray(loss_sup), np.asarray(ref_sup), rtol=1e-4, atol=1e-4), (loss_sup, ref_sup)
    assert np.allclose(np.asarray(loss_sup_t), np.asarray(ref_sup), rtol=1e-4, atol=1e-4), (loss_sup_t, ref_sup)
    assert np.allclose(np.asarray(loss_simclr), np.asarray(ref_simclr), rtol=1e-4, atol=1e-4), (loss_simclr, ref_simclr)
    assert np.allclose(np.asarray(loss_one), np.asarray(ref_one), rtol=1e-4, atol=1e-4), (loss_one, ref_one)

    print("KERNEL_OK")
</pallas_src>

<mosaic_0001>
module attributes {stable_mosaic.version = 11 : i64} {
  func.func @_supcon_kernel(%arg0: i32, %arg1: memref<16x128xf32, #tpu.memory_space<vmem>>, %arg2: memref<16x128xf32, #tpu.memory_space<vmem>>, %arg3: memref<16x1xi32, #tpu.memory_space<vmem>>, %arg4: memref<1x16xi32, #tpu.memory_space<vmem>>, %arg5: memref<1x1xf32, #tpu.memory_space<vmem>>) attributes {dimension_semantics = [#tpu.dimension_semantics<arbitrary>], iteration_bounds = array<i64: 1>, scalar_prefetch = 0 : i64, scratch_operands = 0 : i64, tpu.core_type = #tpu.core_type<tc>, window_params = [{transform_indices = @transform_0, window_bounds = array<i64: 16, 128>}, {pipeline_mode = #tpu.pipeline_mode<synchronous>, transform_indices = @transform_1, window_bounds = array<i64: 16, 128>}, {transform_indices = @transform_2, window_bounds = array<i64: 16, 1>}, {pipeline_mode = #tpu.pipeline_mode<synchronous>, transform_indices = @transform_3, window_bounds = array<i64: 1, 16>}, {pipeline_mode = #tpu.pipeline_mode<synchronous>, transform_indices = @transform_4, window_bounds = array<i64: 1, 1>}]} {
    %c0_i32 = arith.constant 0 : i32
    %0 = arith.cmpi eq, %arg0, %c0_i32 : i32
    %1 = arith.extui %0 : i1 to i32
    %c0_i32_0 = arith.constant 0 : i32
    %2 = arith.cmpi ne, %1, %c0_i32_0 : i32
    scf.if %2 {
      %cst_30 = arith.constant 0.000000e+00 : f32
      %71 = vector.broadcast %cst_30 : f32 to vector<1x1xf32>
      %c0_31 = arith.constant 0 : index
      %c0_32 = arith.constant 0 : index
      %72 = vector.load %arg5[%c0_31, %c0_32] : memref<1x1xf32, #tpu.memory_space<vmem>>, vector<1x1xf32>
      tpu.vector_store %arg5[%c0_31, %c0_32], %71 {strides = array<i32>} : memref<1x1xf32, #tpu.memory_space<vmem>>, vector<1x1xf32>,
    } else {
    }
    %c0 = arith.constant 0 : index
    %c0_1 = arith.constant 0 : index
    %3 = vector.load %arg1[%c0, %c0_1] : memref<16x128xf32, #tpu.memory_space<vmem>>, vector<16x128xf32>
    %c0_2 = arith.constant 0 : index
    %c0_3 = arith.constant 0 : index
    %4 = vector.load %arg2[%c0_2, %c0_3] : memref<16x128xf32, #tpu.memory_space<vmem>>, vector<16x128xf32>
    %cst = arith.constant dense<0.000000e+00> : vector<16x16xf32>
    %5 = tpu.matmul %3, %4, %cst {dimension_numbers = #tpu.dot_dimension_numbers<[1], [1], [0], [0], [0, 0, 1, 0], [], []>} : vector<16x128xf32>, vector<16x128xf32>, vector<16x16xf32> -> vector<16x16xf32>
    %cst_4 = arith.constant 14.2857141 : f32
    %6 = vector.broadcast %cst_4 : f32 to vector<16x16xf32>
    %7 = arith.mulf %5, %6 : vector<16x16xf32>
    %c16_i32 = arith.constant 16 : i32
    %8 = arith.muli %arg0, %c16_i32 : i32
    %9 = tpu.iota {dimensions = array<i32: 0>} : vector<16x16xi32>
    %10 = vector.broadcast %8 : i32 to vector<16x16xi32>
    %11 = arith.addi %10, %9 : vector<16x16xi32>
    %12 = tpu.iota {dimensions = array<i32: 1>} : vector<16x16xi32>
    %c16_i32_5 = arith.constant 16 : i32
    %13 = vector.broadcast %c16_i32_5 : i32 to vector<16x16xi32>
    %14 = arith.cmpi slt, %12, %13 : vector<16x16xi32>
    %15 = arith.cmpi ne, %11, %12 : vector<16x16xi32>
    %16 = arith.andi %14, %15 : vector<16x16xi1>
    %cst_6 = arith.constant 1.000000e+00 : f32
    %cst_7 = arith.constant 0.000000e+00 : f32
    %17 = vector.broadcast %cst_6 : f32 to vector<16x16xf32>
    %18 = vector.broadcast %cst_7 : f32 to vector<16x16xf32>
    %19 = arith.select %16, %17, %18 : vector<16x16xi1>, vector<16x16xf32>
    %c0_8 = arith.constant 0 : index
    %c0_9 = arith.constant 0 : index
    %20 = vector.load %arg3[%c0_8, %c0_9] : memref<16x1xi32, #tpu.memory_space<vmem>>, vector<16x1xi32>
    %c0_10 = arith.constant 0 : index
    %c0_11 = arith.constant 0 : index
    %21 = vector.load %arg4[%c0_10, %c0_11] : memref<1x16xi32, #tpu.memory_space<vmem>>, vector<1x16xi32>
    %22 = vector.broadcast %20 : vector<16x1xi32> to vector<16x16xi32>
    %23 = vector.broadcast %21 : vector<1x16xi32> to vector<16x16xi32>
    %24 = arith.cmpi eq, %22, %23 : vector<16x16xi32>
    %25 = arith.andi %24, %14 : vector<16x16xi1>
    %26 = arith.andi %25, %15 : vector<16x16xi1>
    %cst_12 = arith.constant 1.000000e+00 : f32
    %cst_13 = arith.constant 0.000000e+00 : f32
    %27 = vector.broadcast %cst_12 : f32 to vector<16x16xf32>
    %28 = vector.broadcast %cst_13 : f32 to vector<16x16xf32>
    %29 = arith.select %26, %27, %28 : vector<16x16xi1>, vector<16x16xf32>
    %cst_14 = arith.constant -1.000000e+30 : f32
    %30 = vector.broadcast %cst_14 : f32 to vector<16x16xf32>
    %31 = arith.select %14, %7, %30 : vector<16x16xi1>, vector<16x16xf32>
    %cst_15 = arith.constant dense<0xFF800000> : vector<16xf32>
    %32 = vector.multi_reduction <maximumf>, %31, %cst_15 [1] : vector<16x16xf32> to vector<16xf32>
    %33 = vector.shape_cast %32 : vector<16xf32> to vector<16x1xf32>
    %34 = vector.broadcast %33 : vector<16x1xf32> to vector<16x16xf32>
    %35 = arith.subf %7, %34 : vector<16x16xf32>
    %36 = math.exp %35 : vector<16x16xf32>
    %37 = arith.mulf %36, %19 : vector<16x16xf32>
    %cst_16 = arith.constant dense<0.000000e+00> : vector<16xf32>
    %38 = vector.multi_reduction <add>, %37, %cst_16 [1] : vector<16x16xf32> to vector<16xf32>
    %39 = vector.shape_cast %38 : vector<16xf32> to vector<16x1xf32>
    %40 = math.log %39 : vector<16x1xf32>
    %41 = arith.addf %40, %33 : vector<16x1xf32>
    %cst_17 = arith.constant dense<0.000000e+00> : vector<16xf32>
    %42 = vector.multi_reduction <add>, %29, %cst_17 [1] : vector<16x16xf32> to vector<16xf32>
    %43 = vector.shape_cast %42 : vector<16xf32> to vector<16x1xf32>
    %44 = arith.mulf %29, %7 : vector<16x16xf32>
    %cst_18 = arith.constant dense<0.000000e+00> : vector<16xf32>
    %45 = vector.multi_reduction <add>, %44, %cst_18 [1] : vector<16x16xf32> to vector<16xf32>
    %46 = vector.shape_cast %45 : vector<16xf32> to vector<16x1xf32>
    %c16_i32_19 = arith.constant 16 : i32
    %47 = arith.muli %arg0, %c16_i32_19 : i32
    %48 = tpu.iota {dimensions = array<i32: 0>} : vector<16x1xi32>
    %49 = vector.broadcast %47 : i32 to vector<16x1xi32>
    %50 = arith.addi %49, %48 : vector<16x1xi32>
    %c16_i32_20 = arith.constant 16 : i32
    %51 = vector.broadcast %c16_i32_20 : i32 to vector<16x1xi32>
    %52 = arith.cmpi slt, %50, %51 : vector<16x1xi32>
    %cst_21 = arith.constant 1.000000e+00 : f32
    %53 = vector.broadcast %cst_21 : f32 to vector<16x1xf32>
    %54 = arith.select %52, %43, %53 : vector<16x1xi1>, vector<16x1xf32>
    %55 = arith.mulf %43, %41 : vector<16x1xf32>
    %56 = arith.subf %46, %55 : vector<16x1xf32>
    %57 = arith.divf %56, %54 : vector<16x1xf32>
    %c0_22 = arith.constant 0 : index
    %c0_23 = arith.constant 0 : index
    %58 = vector.load %arg5[%c0_22, %c0_23] : memref<1x1xf32, #tpu.memory_space<vmem>>, vector<1x1xf32>
    %cst_24 = arith.constant 0.000000e+00 : f32
    %59 = vector.broadcast %cst_24 : f32 to vector<16x1xf32>
    %60 = arith.select %52, %57, %59 : vector<16x1xi1>, vector<16x1xf32>
    %61 = vector.shape_cast %60 : vector<16x1xf32> to vector<1x16x1xf32>
    %cst_25 = arith.constant dense<0.000000e+00> : vector<1xf32>
    %62 = vector.multi_reduction <add>, %61, %cst_25 [1, 2] : vector<1x16x1xf32> to vector<1xf32>
    %63 = vector.shape_cast %62 : vector<1xf32> to vector<1x1x1xf32>
    %64 = vector.extract %63[0, 0, 0] : f32 from vector<1x1x1xf32>
    %65 = vector.broadcast %64 : f32 to vector<1x1xf32>
    %66 = arith.addf %58, %65 : vector<1x1xf32>
    %c0_26 = arith.constant 0 : index
    %c0_27 = arith.constant 0 : index
    %67 = vector.load %arg5[%c0_26, %c0_27] : memref<1x1xf32, #tpu.memory_space<vmem>>, vector<1x1xf32>
    tpu.vector_store %arg5[%c0_26, %c0_27], %66 {strides = array<i32>} : memref<1x1xf32, #tpu.memory_space<vmem>>, vector<1x1xf32>,
    %c0_i32_28 = arith.constant 0 : i32
    %68 = arith.cmpi eq, %arg0, %c0_i32_28 : i32
    %69 = arith.extui %68 : i1 to i32
    %c0_i32_29 = arith.constant 0 : i32
    %70 = arith.cmpi ne, %69, %c0_i32_29 : i32
    scf.if %70 {
      %c0_30 = arith.constant 0 : index
      %c0_31 = arith.constant 0 : index
      %71 = vector.load %arg5[%c0_30, %c0_31] : memref<1x1xf32, #tpu.memory_space<vmem>>, vector<1x1xf32>
      %cst_32 = arith.constant -6.250000e-02 : f32
      %72 = vector.broadcast %cst_32 : f32 to vector<1x1xf32>
      %73 = arith.mulf %71, %72 : vector<1x1xf32>
      %c0_33 = arith.constant 0 : index
      %c0_34 = arith.constant 0 : index
      %74 = vector.load %arg5[%c0_33, %c0_34] : memref<1x1xf32, #tpu.memory_space<vmem>>, vector<1x1xf32>
      tpu.vector_store %arg5[%c0_33, %c0_34], %73 {strides = array<i32>} : memref<1x1xf32, #tpu.memory_space<vmem>>, vector<1x1xf32>,
    } else {
    }
    return
  }
  func.func @transform_0(%arg0: i32) -> (i32, i32) {
    %c0_i32 = arith.constant 0 : i32
    %c0_i32_0 = arith.constant 0 : i32
    return %arg0, %c0_i32 : i32, i32
  }
  func.func @transform_1(%arg0: i32) -> (i32, i32) {
    %c0_i32 = arith.constant 0 : i32
    %c0_i32_0 = arith.constant 0 : i32
    %c0_i32_1 = arith.constant 0 : i32
    return %c0_i32, %c0_i32_0 : i32, i32
  }
  func.func @transform_2(%arg0: i32) -> (i32, i32) {
    %c0_i32 = arith.constant 0 : i32
    %c0_i32_0 = arith.constant 0 : i32
    return %arg0, %c0_i32 : i32, i32
  }
  func.func @transform_3(%arg0: i32) -> (i32, i32) {
    %c0_i32 = arith.constant 0 : i32
    %c0_i32_0 = arith.constant 0 : i32
    %c0_i32_1 = arith.constant 0 : i32
    return %c0_i32, %c0_i32_0 : i32, i32
  }
  func.func @transform_4(%arg0: i32) -> (i32, i32) {
    %c0_i32 = arith.constant 0 : i32
    %c0_i32_0 = arith.constant 0 : i32
    %c0_i32_1 = arith.constant 0 : i32
    return %c0_i32, %c0_i32_0 : i32, i32
  }
}

</mosaic_0001>

<llo_original>
// kernel: tpu_custom_call.1
$region0: #{tpu_custom_call.1}
  #allocation0 [shape = 'u32[]', space=smem, size = 0x4, offset = 0x4, fixed_abs, tag = 'smem constant byte address 0x4 - core index']
  #allocation1 [shape = 'u32[144,128]{1,0:T(1,128)}', space=vmem, size = 0x12000, scoped, tag = 'internal scratch']
  %s0 = inlined_call_operand.vmem [shape: f32[16,128], index: 0, kind: input, shape index: {}]
  %s1 = inlined_call_operand.hbm [shape: f32[16,128], index: 1, kind: input, shape index: {}]
  %s2 = inlined_call_operand.vmem [shape: s32[16,1], index: 2, kind: input, shape index: {}]
  %s3 = inlined_call_operand.vmem [shape: s32[1,16], index: 3, kind: input, shape index: {}]
  %s4 = inlined_call_operand.hbm [shape: f32[1,1], index: 4, kind: output, shape index: {}]
  %s5 = sld [smem:[#allocation0]]
  $region38: #{tpu_custom_call.1} parent=0
    _
  %s7 = ssub.s32 1, %s5
  %s8 = scalar_select 0, %s7, %s5
  $region1: #{tpu_custom_call.1} parent=0
    #allocation2 [shape = 'u8[8192]{0}', space=vmem, size = 0x2000, scoped, tag = 'input window, operand 1, single buffered']
    #allocation3 [shape = 's32[1]{0}', space=sflag, size = 0x4, scoped, tag = 'scoped memory for tpu_custom_call.1']
    #allocation4 [shape = 's32[1]{0}', space=sflag, size = 0x4, scoped, tag = 'scoped memory for tpu_custom_call.1']
    #allocation5 [shape = 'u8[512]{0}', space=vmem, size = 0x400, scoped, tag = 'output window, operand 0, single buffered']
    %9 = vsyncpa [#allocation3], 0
    %10 = vsyncpa [#allocation4], 0
    // Predicated region
    $region2: #{tpu_custom_call.1} parent=1 // pred_check
      _
    $region3: #{tpu_custom_call.1} parent=1 // pred_check_branch
      %12 = sbr.rel (0) target = $region5
    $region4: #{tpu_custom_call.1} parent=1 // pred_region
      _
    $region5: #{tpu_custom_call.1} parent=1 // pred_fallthru
      _
    // Predicated region
    $region6: #{tpu_custom_call.1} parent=1 // pred_check
      _
    $region7: #{tpu_custom_call.1} parent=1 // pred_check_branch
      %14 = sbr.rel (0) target = $region9
    $region8: #{tpu_custom_call.1} parent=1 // pred_region
      %s16 = ssub.s32 256, 256
      %17 = vsyncadd [#allocation3], %s16
      %s18 = sshll.u32 [#allocation2], 4
      %s19 = int_to_ptr.vmem [resolvable:$true] %s18
      %24 = dma.hbm_to_vmem [thread:$0]  %s1, 256, %s19, [#allocation3], 128, 128, 8
    $region9: #{tpu_custom_call.1} parent=1 // pred_fallthru
      _
    // Predicated region
    $region10: #{tpu_custom_call.1} parent=1 // pred_check
      _
    $region11: #{tpu_custom_call.1} parent=1 // pred_check_branch
      %26 = sbr.rel (0) target = $region13
    $region12: #{tpu_custom_call.1} parent=1 // pred_region
      _
    $region13: #{tpu_custom_call.1} parent=1 // pred_fallthru
      _
    // Predicated region
    $region14: #{tpu_custom_call.1} parent=1 // pred_check
      _
    $region15: #{tpu_custom_call.1} parent=1 // pred_check_branch
      %28 = sbr.rel (0) target = $region17
    $region16: #{tpu_custom_call.1} parent=1 // pred_region
      _
    $region17: #{tpu_custom_call.1} parent=1 // pred_fallthru
      _
    // Predicated region
    $region18: #{tpu_custom_call.1} parent=1 // pred_check
      _
    $region19: #{tpu_custom_call.1} parent=1 // pred_check_branch
      %30 = sbr.rel (0) target = $region21
    $region20: #{tpu_custom_call.1} parent=1 // pred_region
      %31 = dma.done [#allocation3], 256
    $region21: #{tpu_custom_call.1} parent=1 // pred_fallthru
      _
    %p32 = scmp.eq.s32.totalorder 0, 0
    // Predicated region
    $region22: #{tpu_custom_call.1} parent=1 // pred_check
      %p33 = pneg %p32
    $region23: #{tpu_custom_call.1} parent=1 // pred_check_branch
      %35 = sbr.rel (%p33) target = $region25
    $region24: #{tpu_custom_call.1} parent=1 // pred_region
      %vm36 = vcmask 0
      %37 = vst.msk [vmem:[#allocation5] sm:$0x1] %vm36, 0.0
    $region25: #{tpu_custom_call.1} parent=1 // pred_fallthru
      _
    %v38 = vld [vmem:[%s0] sm:$0xff]
    %v39 = vld [vmem:[%s0 + $0x8] sm:$0xff]
    %v40 = vld [vmem:[#allocation2] sm:$0xff]
    %v41 = vld [vmem:[#allocation2 + $0x8] sm:$0xff]
    %42 = vmatprep.subr.mxu0 0.0
    %43 = vmatpush1.xpose.msra.mxu0 %v40
    %44 = vmatprep.subr.mxu0 0.0
    %45 = vmatpush1.xpose.msra.mxu0 %v41
    %46 = vmatprep.subr.mxu0 0.0
    %47 = vmatpush1.xpose.msra.mxu0 0.0
    %48 = vmatprep.subr.mxu0 0.0
    %49 = vmatpush1.xpose.msra.mxu0 0.0
    %50 = vmatprep.subr.mxu0 0.0
    %51 = vmatpush1.xpose.msra.mxu0 0.0
    %52 = vmatprep.subr.mxu0 0.0
    %53 = vmatpush1.xpose.msra.mxu0 0.0
    %54 = vmatprep.subr.mxu0 0.0
    %55 = vmatpush1.xpose.msra.mxu0 0.0
    %56 = vmatprep.subr.mxu0 0.0
    %57 = vmatpush1.xpose.msra.mxu0 0.0
    %58 = vmatprep.subr.mxu0 0.0
    %59 = vmatpush1.xpose.msra.mxu0 0.0
    %60 = vmatprep.subr.mxu0 0.0
    %61 = vmatpush1.xpose.msra.mxu0 0.0
    %62 = vmatprep.subr.mxu0 0.0
    %63 = vmatpush1.xpose.msra.mxu0 0.0
    %64 = vmatprep.subr.mxu0 0.0
    %65 = vmatpush1.xpose.msra.mxu0 0.0
    %66 = vmatprep.subr.mxu0 0.0
    %67 = vmatpush1.xpose.msra.mxu0 0.0
    %68 = vmatprep.subr.mxu0 0.0
    %69 = vmatpush1.xpose.msra.mxu0 0.0
    %70 = vmatprep.subr.mxu0 0.0
    %71 = vmatpush1.xpose.msra.mxu0 0.0
    %72 = vmatprep.subr.mxu0 0.0
    %73 = vmatpush1.xpose.msra.mxu0 0.0
    %74 = vmatprep.subr.mxu0 0.0
    %75 = vmatpush1.xpose.msra.mxu0 0.0
    %76 = vmatprep.subr.mxu0 0.0
    %77 = vmatpush1.xpose.msra.mxu0 0.0
    %78 = vmatprep.subr.mxu0 0.0
    %79 = vmatpush1.xpose.msra.mxu0 0.0
    %80 = vmatprep.subr.mxu0 0.0
    %81 = vmatpush1.xpose.msra.mxu0 0.0
    %82 = vmatprep.subr.mxu0 0.0
    %83 = vmatpush1.xpose.msra.mxu0 0.0
    %84 = vmatprep.subr.mxu0 0.0
    %85 = vmatpush1.xpose.msra.mxu0 0.0
    %86 = vmatprep.subr.mxu0 0.0
    %87 = vmatpush1.xpose.msra.mxu0 0.0
    %88 = vmatprep.subr.mxu0 0.0
    %89 = vmatpush1.xpose.msra.mxu0 0.0
    %90 = vmatprep.subr.mxu0 0.0
    %91 = vmatpush1.xpose.msra.mxu0 0.0
    %92 = vmatprep.subr.mxu0 0.0
    %93 = vmatpush1.xpose.msra.mxu0 0.0
    %94 = vmatprep.subr.mxu0 0.0
    %95 = vmatpush1.xpose.msra.mxu0 0.0
    %96 = vmatprep.subr.mxu0 0.0
    %97 = vmatpush1.xpose.msra.mxu0 0.0
    %98 = vmatprep.subr.mxu0 0.0
    %99 = vmatpush1.xpose.msra.mxu0 0.0
    %100 = vmatprep.subr.mxu0 0.0
    %101 = vmatpush1.xpose.msra.mxu0 0.0
    %102 = vmatprep.subr.mxu0 0.0
    %103 = vmatpush1.xpose.msra.mxu0 0.0
    %104 = vmatprep.subr.mxu0 0.0
    %105 = vmatpush1.xpose.msra.mxu0 0.0
    %106 = vmatprep.mubr.f32.mxu0 0.0
    %107 = vmatmul.mubr.f32.gmra.mrb[0].mxu0 %v38
    %v108 = vpop.f32.mrb[0].mxu0
    %v109 = vadd.f32 0.0, %v108
    %v110 = vpop.f32.mrb[0].mxu0
    %111 = vmatprep.mubr.f32.mxu0 0.0
    %112 = vmatmul.mubr.f32.gmra.mrb[0].mxu0 %v39
    %v113 = vpop.f32.mrb[0].mxu0
    %v114 = vadd.f32 0.0, %v113
    %v115 = vpop.f32.mrb[0].mxu0
    %116 = vdwg.mxu0
    %v117 = vmul.f32 %v109, 14.285714
    %v118 = vmul.f32 %v114, 14.285714
    %s119 = smul.u32 0, 16
    %v120 = vlaneseq
    %v121 = vshrl.u32 %v120, 7
    %v122 = vadd.s32 %v121, 8
    %v123 = vstv %s119
    %v124 = vadd.s32 %v123, %v121
    %v125 = vadd.s32 %v123, %v122
    %v126 = vlaneseq
    %v127 = vand.u32 %v126, 127
    %vm128 = vcmp.lt.s32.totalorder %v127, 16
    %vm129 = vcmp.ne.s32.totalorder %v124, %v127
    %vm130 = vcmp.ne.s32.totalorder %v125, %v127
    %vm131 = vmand %vm128, %vm129
    %vm132 = vmand %vm128, %vm130
    %v133 = vsel %vm131, 1.0, 0.0
    %v134 = vsel %vm132, 1.0, 0.0
    %v135 = vld [vmem:[%s2] sm:$0xff]
    %v136 = vld [vmem:[%s2 + $0x8] sm:$0xff]
    %v137 = vld [vmem:[%s3] sm:$0x1]
    %138 = vset.pattern.permute.xlu0 0
    %139 = vperm.xlu0 %138, %v135
    %v140 = vpop.permute.xlu0 %139
    %141 = vset.pattern.permute.xlu0 0
    %142 = vperm.xlu0 %141, %v136
    %v143 = vpop.permute.xlu0 %142
    %v144 = vlaneseq
    %v145 = vshrl.u32 %v144, 7
    %v146 = vsub.s32 0, %v145
    %v147 = vrot.slane %v137, %v146
    %vm148 = vcmp.eq.s32.totalorder %v140, %v147
    %vm149 = vcmp.eq.s32.totalorder %v143, %v147
    %vm150 = vmand %vm148, %vm128
    %vm151 = vmand %vm149, %vm128
    %vm152 = vmand %vm150, %vm129
    %vm153 = vmand %vm151, %vm130
    %v154 = vsel %vm152, 1.0, 0.0
    %v155 = vsel %vm153, 1.0, 0.0
    %v156 = vsel %vm128, %v117, -1e+30
    %v157 = vsel %vm128, %v118, -1e+30
    %vm158 = vcmask 130048
    %v159 = vsel %vm158, %v156, -inf
    %160 = vmax.xlane.f32.xlu0 %v159
    %v161 = vpop.xlane.xlu0 %160
    %v162 = vsel %vm158, %v157, -inf
    %163 = vmax.xlane.f32.xlu0 %v162
    %v164 = vpop.xlane.xlu0 %163
    %v165 = vsub.f32 %v117, %v161
    %v166 = vsub.f32 %v118, %v164
    %v167 = vmul.f32 %v165, 1.442695
    %v168 = vpow.pop %v167
    %v169 = vmul.f32 %v166, 1.442695
    %v170 = vpow.pop %v169
    %v171 = vmul.f32 %v168, %v133
    %v172 = vmul.f32 %v170, %v134
    %v173 = vsel %vm158, %v171, 0.0
    %174 = vadd.xlane.f32.xlu0 %v173
    %v175 = vpop.xlane.xlu0 %174
    %v176 = vsel %vm158, %v172, 0.0
    %177 = vadd.xlane.f32.xlu0 %v176
    %v178 = vpop.xlane.xlu0 %177
    %v179 = vlog2.pop %v175
    %v180 = vmul.f32 %v179, 0.6931472
    %v181 = vlog2.pop %v178
    %v182 = vmul.f32 %v181, 0.6931472
    %v183 = vadd.f32 %v180, %v161
    %v184 = vadd.f32 %v182, %v164
    %v185 = vsel %vm158, %v154, 0.0
    %186 = vadd.xlane.f32.xlu0 %v185
    %v187 = vpop.xlane.xlu0 %186
    %v188 = vsel %vm158, %v155, 0.0
    %189 = vadd.xlane.f32.xlu0 %v188
    %v190 = vpop.xlane.xlu0 %189
    %v191 = vmul.f32 %v154, %v117
    %v192 = vmul.f32 %v155, %v118
    %v193 = vsel %vm158, %v191, 0.0
    %194 = vadd.xlane.f32.xlu0 %v193
    %v195 = vpop.xlane.xlu0 %194
    %v196 = vsel %vm158, %v192, 0.0
    %197 = vadd.xlane.f32.xlu0 %v196
    %v198 = vpop.xlane.xlu0 %197
    %vm199 = vcmp.lt.s32.totalorder %v124, 16
    %vm200 = vcmp.lt.s32.totalorder %v125, 16
    %v201 = vsel %vm199, %v187, 1.0
    %v202 = vsel %vm200, %v190, 1.0
    %v203 = vmul.f32 %v187, %v183
    %v204 = vmul.f32 %v190, %v184
    %v205 = vsub.f32 %v195, %v203
    %v206 = vsub.f32 %v198, %v204
    %v207 = vrcp.pop %v201
    %v208 = vmul.f32 %v205, %v207
    %v209 = vrcp.pop %v202
    %v210 = vmul.f32 %v206, %v209
    %v211 = vld [vmem:[#allocation5] sm:$0x1]
    %v212 = vsel %vm199, %v208, 0.0
    %v213 = vsel %vm200, %v210, 0.0
    %vm214 = vcmask 7168
    %v215 = vsel %vm214, %v212, 0.0
    %v216 = vsel %vm214, %v213, 0.0
    %v217 = vadd.f32 %v215, %v216
    %218 = vadd.xlane.f32.xlu0 %v217
    %v219 = vpop.xlane.xlu0 %218
    %v220 = vrot.slane %v219, 4
    %v221 = vadd.f32 %v219, %v220
    %v222 = vrot.slane %v221, 2
    %v223 = vadd.f32 %v221, %v222
    %v224 = vrot.slane %v223, 1
    %v225 = vadd.f32 %v223, %v224
    %s226 = vtos %v225
    %v227 = vstv %s226
    %v228 = vadd.f32 %v211, %v227
    %vm229 = vcmask 0
    %230 = vst.msk [vmem:[#allocation5] sm:$0x1] %vm229, %v228
    // Predicated region
    $region26: #{tpu_custom_call.1} parent=1 // pred_check
      %p231 = pneg %p32
    $region27: #{tpu_custom_call.1} parent=1 // pred_check_branch
      %233 = sbr.rel (%p231) target = $region29
    $region28: #{tpu_custom_call.1} parent=1 // pred_region
      %v234 = vld [vmem:[#allocation5] sm:$0x1]
      %v235 = vmul.f32 %v234, -0.0625
      %236 = vst.msk [vmem:[#allocation5] sm:$0x1] %vm229, %v235
    $region29: #{tpu_custom_call.1} parent=1 // pred_fallthru
      _
    // Predicated region
    $region30: #{tpu_custom_call.1} parent=1 // pred_check
      _
    $region31: #{tpu_custom_call.1} parent=1 // pred_check_branch
      %238 = sbr.rel (0) target = $region33
    $region32: #{tpu_custom_call.1} parent=1 // pred_region
      %s240 = ssub.s32 16, 16
      %241 = vsyncadd [#allocation4], %s240
      %s243 = sshll.u32 [#allocation5], 4
      %s244 = int_to_ptr.vmem [resolvable:$true] %s243
      %246 = dma.vmem_to_hbm [thread:$0]  %s244, 16, %s4, [#allocation4]
    $region33: #{tpu_custom_call.1} parent=1 // pred_fallthru
      _
    // Predicated region
    $region34: #{tpu_custom_call.1} parent=1 // pred_check
      _
    $region35: #{tpu_custom_call.1} parent=1 // pred_check_branch
      %248 = sbr.rel (0) target = $region37
    $region36: #{tpu_custom_call.1} parent=1 // pred_region
      %249 = dma.done [#allocation4], 16
    $region37: #{tpu_custom_call.1} parent=1 // pred_fallthru
      _
    %250 = vsyncpa [#allocation3], 1
    %251 = vsyncpa [#allocation4], 1

</llo_original>
